<compile_context>
chip_gen: v6e
topology: v6e:2x2x1
jax: 0.10.0
libtpu: 0.0.40
codegen_flags: <defaults>
</compile_context>

<pallas_src>
import functools

import jax
import jax.numpy as jnp
from jax.experimental import pallas as pl
from jax.experimental.pallas import tpu as pltpu

_NEG = -1e30  # finite "-inf": keeps 0 * masked_logit == -0.0 (never NaN)


def _round_up(x: int, m: int) -> int:
    return (x + m - 1) // m * m


def _default_tc(d: int, c: int) -> int:
    d_pad = _round_up(d, 128)
    c128 = _round_up(c, 128)
    # W^T tile double-buffer budget ~24 MiB (bf16) -> safe on v7x's 64 MiB VMEM.
    cap = max(128, ((24 * 1024 * 1024) // (4 * d_pad)) // 128 * 128)
    return min(2048, cap, c128)


def _default_tb(b: int, d: int) -> int:
    d_pad = _round_up(d, 128)
    b16 = _round_up(b, 16)
    # Embedding tile double-buffer budget ~16 MiB (bf16).
    cap = max(16, ((4 * 1024 * 1024) // d_pad) // 16 * 16)
    if b16 <= min(1024, cap):
        return b16          # whole batch in one tile -> emb and each W^T tile DMA'd once
    return min(512, cap)


def prepare_weight_t(weight_t, *, tc=None):
    """Hoist the per-call classifier-weight cast/pad out of the training step.

    weight_t: (D, C) float classifier weight, kept pre-transposed.  Returns a
    zero-padded bf16 (d_pad, c_pad) array to be reused across steps; pass
    num_classes=C (and the same tc, if given) to mixing_loss.
    """
    d, c = weight_t.shape
    tc = _round_up(tc, 128) if tc is not None else _default_tc(d, c)
    d_pad = _round_up(d, 128)
    c_pad = _round_up(c, tc)
    return jnp.pad(weight_t.astype(jnp.bfloat16), ((0, d_pad - d), (0, c_pad - c)))


def _mixing_loss_kernel(lam_ref, emb_ref, wt_ref, labs_ref, out_ref,
                        m_ref, l_ref, t_ref, *,
                        n_batch, n_classes, tb, tc, ragged_c):
    k = pl.program_id(0)          # class tile (reduction axis, OUTER: W^T streamed once)
    i = pl.program_id(1)          # batch tile (INNER)
    n_ct = pl.num_programs(0)

    @pl.when(k == 0)
    def _init_rows():
        m_ref[i] = jnp.full((tb, 1), _NEG, jnp.float32)
        l_ref[i] = jnp.zeros((tb, 1), jnp.float32)
        t_ref[i] = jnp.zeros((tb, 1), jnp.float32)

    # (tb, d_pad) @ (d_pad, tc) on the MXU: bf16 inputs, f32 accumulation.
    logits = jnp.dot(emb_ref[...], wt_ref[...], preferred_element_type=jnp.float32)

    # Local column index within this class tile; labels shifted by the tile base
    # (per-row scalar subtract) instead of materializing global class ids.
    col = jax.lax.broadcasted_iota(jnp.int32, (tb, tc), 1)
    base = k * tc
    labs = labs_ref[...]
    lab = labs[:, 0:1] - base
    mix = labs[:, 1:2] - base
    lam = lam_ref[0, 0]

    # Fused mixup-target reduce.  No class-padding mask needed: labels < n_classes,
    # and padded W^T columns are zeros, so w == 0 never multiplies a non-finite value.
    w = (jnp.where(col == lab, lam, 0.0) + jnp.where(col == mix, 1.0 - lam, 0.0))
    t_ref[i] = t_ref[i] + jnp.sum(w * logits, axis=-1, keepdims=True)

    def _lse_update(z):
        m_prev = m_ref[i]
        m_new = jnp.maximum(m_prev, jnp.max(z, axis=-1, keepdims=True))
        l_ref[i] = (l_ref[i] * jnp.exp(m_prev - m_new)
                    + jnp.sum(jnp.exp(z - m_new), axis=-1, keepdims=True))
        m_ref[i] = m_new

    if ragged_c:
        # Only the last class tile contains padded columns -> mask only there.
        @pl.when(k < n_ct - 1)
        def _body():
            _lse_update(logits)

        @pl.when(k == n_ct - 1)
        def _body_last():
            _lse_update(jnp.where(col < n_classes - base, logits, _NEG))
    else:
        _lse_update(logits)

    @pl.when(k == n_ct - 1)
    def _finalize():
        rows = i * tb + jax.lax.broadcasted_iota(jnp.int32, (tb, 1), 0)
        valid = (rows < n_batch).astype(jnp.float32)          # drop padded batch rows
        per_row = (m_ref[i] + jnp.log(l_ref[i]) - t_ref[i]) * valid
        # Lane-dense (1, 8, 128) partial per batch tile; summed + divided by B in JAX.
        out_ref[...] = jnp.full(out_ref.shape, jnp.sum(per_row), jnp.float32)


def mixing_loss(embeddings, weight_t, labels, mixed_labels, lam, *,
                num_classes=None, tb=None, tc=None):
    """embeddings: (B, D) float; weight_t: raw (D, C) float weight OR the bf16
    padded array from prepare_weight_t (then pass num_classes=C);
    labels / mixed_labels: (B,) int; lam: scalar mixup coefficient."""
    b, d = embeddings.shape
    d_pad = _round_up(d, 128)

    if num_classes is None:
        # Convenience path: cast/pad every call.  Prefer prepare_weight_t + num_classes=.
        num_classes = weight_t.shape[1]
        tc = _round_up(tc, 128) if tc is not None else _default_tc(d, num_classes)
        weight_t = prepare_weight_t(weight_t, tc=tc)
    else:
        tc = _round_up(tc, 128) if tc is not None else _default_tc(d, num_classes)

    dw, c_pad = weight_t.shape
    assert weight_t.dtype == jnp.bfloat16, "prepared weight must be bf16"
    assert dw == d_pad, (dw, d_pad)
    assert c_pad % tc == 0 and c_pad >= num_classes, (c_pad, tc, num_classes)

    tb = _round_up(tb, 16) if tb is not None else _default_tb(b, d)
    b_pad = _round_up(b, tb)
    n_bt = b_pad // tb
    n_ct = c_pad // tc
    ragged_c = (c_pad != num_classes)

    emb = jnp.pad(embeddings.astype(jnp.bfloat16), ((0, b_pad - b), (0, d_pad - d)))
    labs = jnp.stack([labels.astype(jnp.int32), mixed_labels.astype(jnp.int32)], axis=-1)
    labs = jnp.pad(labs, ((0, b_pad - b), (0, 0)))
    lam_arr = jnp.asarray(lam, jnp.float32).reshape(1, 1)

    kernel = functools.partial(_mixing_loss_kernel, n_batch=b, n_classes=num_classes,
                               tb=tb, tc=tc, ragged_c=ragged_c)

    # VMEM limit sized from the real double-buffered working set; capped at 64 MiB so
    # the same config fits v7x (raise toward 96 MiB on 128-MiB v5e/v6e for huge tiles).
    tile_bytes = 2 * (tb * d_pad * 2 + d_pad * tc * 2 + tb * 2 * 4 + 8 * 128 * 4)
    scratch_bytes = 3 * n_bt * tb * 4
    vmem_limit = min(64 * 1024 * 1024,
                     max(32 * 1024 * 1024, tile_bytes + scratch_bytes + 8 * 1024 * 1024))

    emb_fetches = 1 if n_bt == 1 else n_ct   # emb block stays resident when n_bt == 1

    partials = pl.pallas_call(
        kernel,
        out_shape=jax.ShapeDtypeStruct((n_bt, 8, 128), jnp.float32),
        grid_spec=pltpu.PrefetchScalarGridSpec(
            num_scalar_prefetch=0,
            grid=(n_ct, n_bt),   # class axis OUTER -> each W^T tile is DMA'd exactly once
            in_specs=[
                pl.BlockSpec(memory_space=pltpu.MemorySpace.SMEM),     # lam (1, 1)
                pl.BlockSpec((tb, d_pad), lambda k, i: (i, 0)),        # embeddings tile
                pl.BlockSpec((d_pad, tc), lambda k, i: (0, k)),        # W^T tile (k only)
                pl.BlockSpec((tb, 2), lambda k, i: (i, 0)),            # packed labels
            ],
            out_specs=pl.BlockSpec((1, 8, 128), lambda k, i: (i, 0, 0)),  # per-tile partial
            scratch_shapes=[
                pltpu.VMEM((n_bt, tb, 1), jnp.float32),   # running max  m
                pltpu.VMEM((n_bt, tb, 1), jnp.float32),   # running sum  l
                pltpu.VMEM((n_bt, tb, 1), jnp.float32),   # mixup-target logits
            ],
        ),
        compiler_params=pltpu.CompilerParams(
            # TODO(synk): per-batch-tile partials would make a core-parallel batch axis
            # safe on v7x, but parallel axes must lead the grid, which would re-stream
            # W^T per core; keep both arbitrary here.
            dimension_semantics=("arbitrary", "arbitrary"),
            vmem_limit_bytes=int(vmem_limit),
        ),
        cost_estimate=pl.CostEstimate(
            flops=2 * b_pad * d_pad * c_pad,
            transcendentals=b_pad * c_pad,
            bytes_accessed=(emb.size * 2 * emb_fetches + weight_t.size * 2
                            + labs.size * 4 * n_ct + n_bt * 8 * 128 * 4),
        ),
    )(lam_arr, emb, weight_t, labs)

    return jnp.sum(partials[:, 0, 0]) / b


def _reference(embeddings, weight_t, labels, mixed_labels, lam):
    logits = embeddings @ weight_t
    logp = jax.nn.log_softmax(logits, axis=-1)
    ce1 = -jnp.mean(jnp.take_along_axis(logp, labels[:, None], axis=-1))
    ce2 = -jnp.mean(jnp.take_along_axis(logp, mixed_labels[:, None], axis=-1))
    return lam * ce1 + (1.0 - lam) * ce2


if __name__ == "__main__":
    key = jax.random.PRNGKey(0)

    # Case 1: tiny shapes, convenience path (raw f32 weight), single-tile grid with
    # class/contraction/batch padding + ragged-class masking.
    k1, k2, k3, k4, key = jax.random.split(key, 5)
    B, D, C = 8, 32, 16
    emb = jax.random.normal(k1, (B, D), jnp.float32)
    w_t = (jax.random.normal(k2, (C, D), jnp.float32) * 0.1).T
    lab = jax.random.randint(k3, (B,), 0, C, jnp.int32)
    mix = jax.random.randint(k4, (B,), 0, C, jnp.int32)
    lam = 0.7
    out1 = jax.block_until_ready(mixing_loss(emb, w_t, lab, mix, lam))
    ref1 = _reference(emb, w_t, lab, mix, lam)
    assert jnp.allclose(out1, ref1, atol=5e-2, rtol=5e-2), (out1, ref1)

    # Case 2: multi-tile grid on both axes, hoisted/prepared weight, ragged last class
    # tile (mask only there), multiple batch tiles sharing persistent row state.
    k1, k2, k3, k4, key = jax.random.split(key, 5)
    B, D, C = 40, 96, 200
    emb = jax.random.normal(k1, (B, D), jnp.float32)
    w_t = (jax.random.normal(k2, (C, D), jnp.float32) * 0.1).T
    w_prep = prepare_weight_t(w_t, tc=128)      # hoisted cast/pad: reuse across steps
    lab = jax.random.randint(k3, (B,), 0, C, jnp.int32)
    mix = jax.random.randint(k4, (B,), 0, C, jnp.int32)
    lam = 0.3
    out2 = jax.block_until_ready(
        mixing_loss(emb, w_prep, lab, mix, lam, num_classes=C, tb=16, tc=128))
    ref2 = _reference(emb, w_t, lab, mix, lam)
    assert jnp.allclose(out2, ref2, atol=5e-2, rtol=5e-2), (out2, ref2)

    # Case 3: class count divides tc -> mask-free compile path; single batch tile so
    # embeddings and every W^T tile are each DMA'd exactly once.
    k1, k2, k3, k4, key = jax.random.split(key, 5)
    B, D, C = 24, 64, 256
    emb = jax.random.normal(k1, (B, D), jnp.float32)
    w_t = (jax.random.normal(k2, (C, D), jnp.float32) * 0.1).T
    w_prep = prepare_weight_t(w_t, tc=128)
    lab = jax.random.randint(k3, (B,), 0, C, jnp.int32)
    mix = jax.random.randint(k4, (B,), 0, C, jnp.int32)
    lam = 0.5
    out3 = jax.block_until_ready(
        mixing_loss(emb, w_prep, lab, mix, lam, num_classes=C, tc=128))
    ref3 = _reference(emb, w_t, lab, mix, lam)
    assert jnp.allclose(out3, ref3, atol=5e-2, rtol=5e-2), (out3, ref3)

    print("KERNEL_OK")
</pallas_src>

<mosaic_0001>
module attributes {stable_mosaic.version = 11 : i64} {
  func.func @_mixing_loss_kernel(%arg0: i32, %arg1: i32, %arg2: memref<1x1xf32, #tpu.memory_space<smem>>, %arg3: memref<16x128xbf16, #tpu.memory_space<vmem>>, %arg4: memref<128x128xbf16, #tpu.memory_space<vmem>>, %arg5: memref<16x2xi32, #tpu.memory_space<vmem>>, %arg6: memref<1x8x128xf32, #tpu.memory_space<vmem>>, %arg7: memref<1x16x1xf32, #tpu.memory_space<vmem>>, %arg8: memref<1x16x1xf32, #tpu.memory_space<vmem>>, %arg9: memref<1x16x1xf32, #tpu.memory_space<vmem>>) attributes {dimension_semantics = [#tpu.dimension_semantics<arbitrary>, #tpu.dimension_semantics<arbitrary>], iteration_bounds = array<i64: 1, 1>, scalar_prefetch = 0 : i64, scratch_operands = 3 : i64, tpu.core_type = #tpu.core_type<tc>, window_params = [{transform_indices = @transform_0, window_bounds = array<i64: 1, 1>}, {transform_indices = @transform_1, window_bounds = array<i64: 16, 128>}, {transform_indices = @transform_2, window_bounds = array<i64: 128, 128>}, {transform_indices = @transform_3, window_bounds = array<i64: 16, 2>}, {transform_indices = @transform_4, window_bounds = array<i64: 1, 8, 128>}]} {
    %c0_i32 = arith.constant 0 : i32
    %0 = arith.cmpi eq, %arg0, %c0_i32 : i32
    %1 = arith.extui %0 : i1 to i32
    %c0_i32_0 = arith.constant 0 : i32
    %2 = arith.cmpi ne, %1, %c0_i32_0 : i32
    scf.if %2 {
      %cst_22 = arith.constant -1.000000e+30 : f32
      %48 = vector.broadcast %cst_22 : f32 to vector<16x1xf32>
      %49 = arith.index_cast %arg1 : i32 to index
      %c0_23 = arith.constant 0 : index
      %c0_24 = arith.constant 0 : index
      %50 = vector.load %arg7[%49, %c0_23, %c0_24] : memref<1x16x1xf32, #tpu.memory_space<vmem>>, vector<1x16x1xf32>
      %51 = vector.shape_cast %50 : vector<1x16x1xf32> to vector<16x1xf32>
      %52 = vector.shape_cast %48 : vector<16x1xf32> to vector<1x16x1xf32>
      tpu.vector_store %arg7[%49, %c0_23, %c0_24], %52 {strides = array<i32>} : memref<1x16x1xf32, #tpu.memory_space<vmem>>, vector<1x16x1xf32>,
      %cst_25 = arith.constant 0.000000e+00 : f32
      %53 = vector.broadcast %cst_25 : f32 to vector<16x1xf32>
      %54 = arith.index_cast %arg1 : i32 to index
      %c0_26 = arith.constant 0 : index
      %c0_27 = arith.constant 0 : index
      %55 = vector.load %arg8[%54, %c0_26, %c0_27] : memref<1x16x1xf32, #tpu.memory_space<vmem>>, vector<1x16x1xf32>
      %56 = vector.shape_cast %55 : vector<1x16x1xf32> to vector<16x1xf32>
      %57 = vector.shape_cast %53 : vector<16x1xf32> to vector<1x16x1xf32>
      tpu.vector_store %arg8[%54, %c0_26, %c0_27], %57 {strides = array<i32>} : memref<1x16x1xf32, #tpu.memory_space<vmem>>, vector<1x16x1xf32>,
      %cst_28 = arith.constant 0.000000e+00 : f32
      %58 = vector.broadcast %cst_28 : f32 to vector<16x1xf32>
      %59 = arith.index_cast %arg1 : i32 to index
      %c0_29 = arith.constant 0 : index
      %c0_30 = arith.constant 0 : index
      %60 = vector.load %arg9[%59, %c0_29, %c0_30] : memref<1x16x1xf32, #tpu.memory_space<vmem>>, vector<1x16x1xf32>
      %61 = vector.shape_cast %60 : vector<1x16x1xf32> to vector<16x1xf32>
      %62 = vector.shape_cast %58 : vector<16x1xf32> to vector<1x16x1xf32>
      tpu.vector_store %arg9[%59, %c0_29, %c0_30], %62 {strides = array<i32>} : memref<1x16x1xf32, #tpu.memory_space<vmem>>, vector<1x16x1xf32>,
    } else {
    }
    %c0 = arith.constant 0 : index
    %c0_1 = arith.constant 0 : index
    %3 = vector.load %arg3[%c0, %c0_1] : memref<16x128xbf16, #tpu.memory_space<vmem>>, vector<16x128xbf16>
    %c0_2 = arith.constant 0 : index
    %c0_3 = arith.constant 0 : index
    %4 = vector.load %arg4[%c0_2, %c0_3] : memref<128x128xbf16, #tpu.memory_space<vmem>>, vector<128x128xbf16>
    %cst = arith.constant dense<0.000000e+00> : vector<16x128xf32>
    %5 = tpu.matmul %3, %4, %cst {dimension_numbers = #tpu.dot_dimension_numbers<[1], [0], [0], [1], [0, 0, 1, 1], [], []>} : vector<16x128xbf16>, vector<128x128xbf16>, vector<16x128xf32> -> vector<16x128xf32>
    %6 = tpu.iota {dimensions = array<i32: 1>} : vector<16x128xi32>
    %c128_i32 = arith.constant 128 : i32
    %7 = arith.muli %arg0, %c128_i32 : i32
    %c0_4 = arith.constant 0 : index
    %c0_5 = arith.constant 0 : index
    %8 = vector.load %arg5[%c0_4, %c0_5] : memref<16x2xi32, #tpu.memory_space<vmem>>, vector<16x2xi32>
    %9 = vector.extract_strided_slice %8 {offsets = [0, 0], sizes = [16, 1], strides = [1, 1]} : vector<16x2xi32> to vector<16x1xi32>
    %10 = vector.broadcast %7 : i32 to vector<16x1xi32>
    %11 = arith.subi %9, %10 : vector<16x1xi32>
    %12 = vector.extract_strided_slice %8 {offsets = [0, 1], sizes = [16, 1], strides = [1, 1]} : vector<16x2xi32> to vector<16x1xi32>
    %13 = vector.broadcast %7 : i32 to vector<16x1xi32>
    %14 = arith.subi %12, %13 : vector<16x1xi32>
    %c0_6 = arith.constant 0 : index
    %c0_7 = arith.constant 0 : index
    %15 = memref.load %arg2[%c0_6, %c0_7] : memref<1x1xf32, #tpu.memory_space<smem>>
    %16 = vector.broadcast %11 : vector<16x1xi32> to vector<16x128xi32>
    %17 = arith.cmpi eq, %6, %16 : vector<16x128xi32>
    %cst_8 = arith.constant 0.000000e+00 : f32
    %18 = vector.broadcast %15 : f32 to vector<16x128xf32>
    %19 = vector.broadcast %cst_8 : f32 to vector<16x128xf32>
    %20 = arith.select %17, %18, %19 : vector<16x128xi1>, vector<16x128xf32>
    %21 = vector.broadcast %14 : vector<16x1xi32> to vector<16x128xi32>
    %22 = arith.cmpi eq, %6, %21 : vector<16x128xi32>
    %cst_9 = arith.constant 1.000000e+00 : f32
    %23 = arith.subf %cst_9, %15 : f32
    %cst_10 = arith.constant 0.000000e+00 : f32
    %24 = vector.broadcast %23 : f32 to vector<16x128xf32>
    %25 = vector.broadcast %cst_10 : f32 to vector<16x128xf32>
    %26 = arith.select %22, %24, %25 : vector<16x128xi1>, vector<16x128xf32>
    %27 = arith.addf %20, %26 : vector<16x128xf32>
    %28 = arith.index_cast %arg1 : i32 to index
    %c0_11 = arith.constant 0 : index
    %c0_12 = arith.constant 0 : index
    %29 = vector.load %arg9[%28, %c0_11, %c0_12] : memref<1x16x1xf32, #tpu.memory_space<vmem>>, vector<1x16x1xf32>
    %30 = vector.shape_cast %29 : vector<1x16x1xf32> to vector<16x1xf32>
    %31 = arith.mulf %27, %5 : vector<16x128xf32>
    %cst_13 = arith.constant dense<0.000000e+00> : vector<16xf32>
    %32 = vector.multi_reduction <add>, %31, %cst_13 [1] : vector<16x128xf32> to vector<16xf32>
    %33 = vector.shape_cast %32 : vector<16xf32> to vector<16x1xf32>
    %34 = arith.addf %30, %33 : vector<16x1xf32>
    %35 = arith.index_cast %arg1 : i32 to index
    %c0_14 = arith.constant 0 : index
    %c0_15 = arith.constant 0 : index
    %36 = vector.load %arg9[%35, %c0_14, %c0_15] : memref<1x16x1xf32, #tpu.memory_space<vmem>>, vector<1x16x1xf32>
    %37 = vector.shape_cast %36 : vector<1x16x1xf32> to vector<16x1xf32>
    %38 = vector.shape_cast %34 : vector<16x1xf32> to vector<1x16x1xf32>
    tpu.vector_store %arg9[%35, %c0_14, %c0_15], %38 {strides = array<i32>} : memref<1x16x1xf32, #tpu.memory_space<vmem>>, vector<1x16x1xf32>,
    %c0_i32_16 = arith.constant 0 : i32
    %39 = arith.cmpi slt, %arg0, %c0_i32_16 : i32
    %40 = arith.extui %39 : i1 to i32
    %c0_i32_17 = arith.constant 0 : i32
    %41 = arith.cmpi ne, %40, %c0_i32_17 : i32
    scf.if %41 {
      %48 = arith.index_cast %arg1 : i32 to index
      %c0_22 = arith.constant 0 : index
      %c0_23 = arith.constant 0 : index
      %49 = vector.load %arg7[%48, %c0_22, %c0_23] : memref<1x16x1xf32, #tpu.memory_space<vmem>>, vector<1x16x1xf32>
      %50 = vector.shape_cast %49 : vector<1x16x1xf32> to vector<16x1xf32>
      %cst_24 = arith.constant dense<0xFF800000> : vector<16xf32>
      %51 = vector.multi_reduction <maximumf>, %5, %cst_24 [1] : vector<16x128xf32> to vector<16xf32>
      %52 = vector.shape_cast %51 : vector<16xf32> to vector<16x1xf32>
      %53 = arith.maximumf %50, %52 : vector<16x1xf32>
      %54 = arith.index_cast %arg1 : i32 to index
      %c0_25 = arith.constant 0 : index
      %c0_26 = arith.constant 0 : index
      %55 = vector.load %arg8[%54, %c0_25, %c0_26] : memref<1x16x1xf32, #tpu.memory_space<vmem>>, vector<1x16x1xf32>
      %56 = vector.shape_cast %55 : vector<1x16x1xf32> to vector<16x1xf32>
      %57 = arith.subf %50, %53 : vector<16x1xf32>
      %58 = math.exp %57 : vector<16x1xf32>
      %59 = arith.mulf %56, %58 : vector<16x1xf32>
      %60 = vector.broadcast %53 : vector<16x1xf32> to vector<16x128xf32>
      %61 = arith.subf %5, %60 : vector<16x128xf32>
      %62 = math.exp %61 : vector<16x128xf32>
      %cst_27 = arith.constant dense<0.000000e+00> : vector<16xf32>
      %63 = vector.multi_reduction <add>, %62, %cst_27 [1] : vector<16x128xf32> to vector<16xf32>
      %64 = vector.shape_cast %63 : vector<16xf32> to vector<16x1xf32>
      %65 = arith.addf %59, %64 : vector<16x1xf32>
      %66 = arith.index_cast %arg1 : i32 to index
      %c0_28 = arith.constant 0 : index
      %c0_29 = arith.constant 0 : index
      %67 = vector.load %arg8[%66, %c0_28, %c0_29] : memref<1x16x1xf32, #tpu.memory_space<vmem>>, vector<1x16x1xf32>
      %68 = vector.shape_cast %67 : vector<1x16x1xf32> to vector<16x1xf32>
      %69 = vector.shape_cast %65 : vector<16x1xf32> to vector<1x16x1xf32>
      tpu.vector_store %arg8[%66, %c0_28, %c0_29], %69 {strides = array<i32>} : memref<1x16x1xf32, #tpu.memory_space<vmem>>, vector<1x16x1xf32>,
      %70 = arith.index_cast %arg1 : i32 to index
      %c0_30 = arith.constant 0 : index
      %c0_31 = arith.constant 0 : index
      %71 = vector.load %arg7[%70, %c0_30, %c0_31] : memref<1x16x1xf32, #tpu.memory_space<vmem>>, vector<1x16x1xf32>
      %72 = vector.shape_cast %71 : vector<1x16x1xf32> to vector<16x1xf32>
      %73 = vector.shape_cast %53 : vector<16x1xf32> to vector<1x16x1xf32>
      tpu.vector_store %arg7[%70, %c0_30, %c0_31], %73 {strides = array<i32>} : memref<1x16x1xf32, #tpu.memory_space<vmem>>, vector<1x16x1xf32>,
    } else {
    }
    %c0_i32_18 = arith.constant 0 : i32
    %42 = arith.cmpi eq, %arg0, %c0_i32_18 : i32
    %43 = arith.extui %42 : i1 to i32
    %c0_i32_19 = arith.constant 0 : i32
    %44 = arith.cmpi ne, %43, %c0_i32_19 : i32
    scf.if %44 {
      %c16_i32 = arith.constant 16 : i32
      %48 = arith.subi %c16_i32, %7 : i32
      %49 = vector.broadcast %48 : i32 to vector<16x128xi32>
      %50 = arith.cmpi slt, %6, %49 : vector<16x128xi32>
      %cst_22 = arith.constant -1.000000e+30 : f32
      %51 = vector.broadcast %cst_22 : f32 to vector<16x128xf32>
      %52 = arith.select %50, %5, %51 : vector<16x128xi1>, vector<16x128xf32>
      %53 = arith.index_cast %arg1 : i32 to index
      %c0_23 = arith.constant 0 : index
      %c0_24 = arith.constant 0 : index
      %54 = vector.load %arg7[%53, %c0_23, %c0_24] : memref<1x16x1xf32, #tpu.memory_space<vmem>>, vector<1x16x1xf32>
      %55 = vector.shape_cast %54 : vector<1x16x1xf32> to vector<16x1xf32>
      %cst_25 = arith.constant dense<0xFF800000> : vector<16xf32>
      %56 = vector.multi_reduction <maximumf>, %52, %cst_25 [1] : vector<16x128xf32> to vector<16xf32>
      %57 = vector.shape_cast %56 : vector<16xf32> to vector<16x1xf32>
      %58 = arith.maximumf %55, %57 : vector<16x1xf32>
      %59 = arith.index_cast %arg1 : i32 to index
      %c0_26 = arith.constant 0 : index
      %c0_27 = arith.constant 0 : index
      %60 = vector.load %arg8[%59, %c0_26, %c0_27] : memref<1x16x1xf32, #tpu.memory_space<vmem>>, vector<1x16x1xf32>
      %61 = vector.shape_cast %60 : vector<1x16x1xf32> to vector<16x1xf32>
      %62 = arith.subf %55, %58 : vector<16x1xf32>
      %63 = math.exp %62 : vector<16x1xf32>
      %64 = arith.mulf %61, %63 : vector<16x1xf32>
      %65 = vector.broadcast %58 : vector<16x1xf32> to vector<16x128xf32>
      %66 = arith.subf %52, %65 : vector<16x128xf32>
      %67 = math.exp %66 : vector<16x128xf32>
      %cst_28 = arith.constant dense<0.000000e+00> : vector<16xf32>
      %68 = vector.multi_reduction <add>, %67, %cst_28 [1] : vector<16x128xf32> to vector<16xf32>
      %69 = vector.shape_cast %68 : vector<16xf32> to vector<16x1xf32>
      %70 = arith.addf %64, %69 : vector<16x1xf32>
      %71 = arith.index_cast %arg1 : i32 to index
      %c0_29 = arith.constant 0 : index
      %c0_30 = arith.constant 0 : index
      %72 = vector.load %arg8[%71, %c0_29, %c0_30] : memref<1x16x1xf32, #tpu.memory_space<vmem>>, vector<1x16x1xf32>
      %73 = vector.shape_cast %72 : vector<1x16x1xf32> to vector<16x1xf32>
      %74 = vector.shape_cast %70 : vector<16x1xf32> to vector<1x16x1xf32>
      tpu.vector_store %arg8[%71, %c0_29, %c0_30], %74 {strides = array<i32>} : memref<1x16x1xf32, #tpu.memory_space<vmem>>, vector<1x16x1xf32>,
      %75 = arith.index_cast %arg1 : i32 to index
      %c0_31 = arith.constant 0 : index
      %c0_32 = arith.constant 0 : index
      %76 = vector.load %arg7[%75, %c0_31, %c0_32] : memref<1x16x1xf32, #tpu.memory_space<vmem>>, vector<1x16x1xf32>
      %77 = vector.shape_cast %76 : vector<1x16x1xf32> to vector<16x1xf32>
      %78 = vector.shape_cast %58 : vector<16x1xf32> to vector<1x16x1xf32>
      tpu.vector_store %arg7[%75, %c0_31, %c0_32], %78 {strides = array<i32>} : memref<1x16x1xf32, #tpu.memory_space<vmem>>, vector<1x16x1xf32>,
    } else {
    }
    %c0_i32_20 = arith.constant 0 : i32
    %45 = arith.cmpi eq, %arg0, %c0_i32_20 : i32
    %46 = arith.extui %45 : i1 to i32
    %c0_i32_21 = arith.constant 0 : i32
    %47 = arith.cmpi ne, %46, %c0_i32_21 : i32
    scf.if %47 {
      %c16_i32 = arith.constant 16 : i32
      %48 = arith.muli %arg1, %c16_i32 : i32
      %49 = tpu.iota {dimensions = array<i32: 0>} : vector<16x1xi32>
      %50 = vector.broadcast %48 : i32 to vector<16x1xi32>
      %51 = arith.addi %50, %49 : vector<16x1xi32>
      %c8_i32 = arith.constant 8 : i32
      %52 = vector.broadcast %c8_i32 : i32 to vector<16x1xi32>
      %53 = arith.cmpi slt, %51, %52 : vector<16x1xi32>
      %54 = arith.extui %53 : vector<16x1xi1> to vector<16x1xi32>
      %55 = arith.sitofp %54 : vector<16x1xi32> to vector<16x1xf32>
      %56 = arith.index_cast %arg1 : i32 to index
      %c0_22 = arith.constant 0 : index
      %c0_23 = arith.constant 0 : index
      %57 = vector.load %arg7[%56, %c0_22, %c0_23] : memref<1x16x1xf32, #tpu.memory_space<vmem>>, vector<1x16x1xf32>
      %58 = vector.shape_cast %57 : vector<1x16x1xf32> to vector<16x1xf32>
      %59 = arith.index_cast %arg1 : i32 to index
      %c0_24 = arith.constant 0 : index
      %c0_25 = arith.constant 0 : index
      %60 = vector.load %arg8[%59, %c0_24, %c0_25] : memref<1x16x1xf32, #tpu.memory_space<vmem>>, vector<1x16x1xf32>
      %61 = vector.shape_cast %60 : vector<1x16x1xf32> to vector<16x1xf32>
      %62 = math.log %61 : vector<16x1xf32>
      %63 = arith.addf %58, %62 : vector<16x1xf32>
      %64 = arith.index_cast %arg1 : i32 to index
      %c0_26 = arith.constant 0 : index
      %c0_27 = arith.constant 0 : index
      %65 = vector.load %arg9[%64, %c0_26, %c0_27] : memref<1x16x1xf32, #tpu.memory_space<vmem>>, vector<1x16x1xf32>
      %66 = vector.shape_cast %65 : vector<1x16x1xf32> to vector<16x1xf32>
      %67 = arith.subf %63, %66 : vector<16x1xf32>
      %68 = arith.mulf %67, %55 : vector<16x1xf32>
      %69 = vector.shape_cast %68 : vector<16x1xf32> to vector<1x16x1xf32>
      %cst_28 = arith.constant dense<0.000000e+00> : vector<1xf32>
      %70 = vector.multi_reduction <add>, %69, %cst_28 [1, 2] : vector<1x16x1xf32> to vector<1xf32>
      %71 = vector.shape_cast %70 : vector<1xf32> to vector<1x1x1xf32>
      %72 = vector.extract %71[0, 0, 0] : f32 from vector<1x1x1xf32>
      %73 = vector.broadcast %72 : f32 to vector<1x8x128xf32>
      %c0_29 = arith.constant 0 : index
      %c0_30 = arith.constant 0 : index
      %c0_31 = arith.constant 0 : index
      %74 = vector.load %arg6[%c0_29, %c0_30, %c0_31] : memref<1x8x128xf32, #tpu.memory_space<vmem>>, vector<1x8x128xf32>
      tpu.vector_store %arg6[%c0_29, %c0_30, %c0_31], %73 {strides = array<i32>} : memref<1x8x128xf32, #tpu.memory_space<vmem>>, vector<1x8x128xf32>,
    } else {
    }
    return
  }
  func.func @transform_0(%arg0: i32, %arg1: i32) -> (i32, i32) {
    %c0_i32 = arith.constant 0 : i32
    %c0_i32_0 = arith.constant 0 : i32
    %c0_i32_1 = arith.constant 0 : i32
    return %c0_i32, %c0_i32_0 : i32, i32
  }
  func.func @transform_1(%arg0: i32, %arg1: i32) -> (i32, i32) {
    %c0_i32 = arith.constant 0 : i32
    %c0_i32_0 = arith.constant 0 : i32
    return %arg1, %c0_i32 : i32, i32
  }
  func.func @transform_2(%arg0: i32, %arg1: i32) -> (i32, i32) {
    %c0_i32 = arith.constant 0 : i32
    %c0_i32_0 = arith.constant 0 : i32
    return %c0_i32, %arg0 : i32, i32
  }
  func.func @transform_3(%arg0: i32, %arg1: i32) -> (i32, i32) {
    %c0_i32 = arith.constant 0 : i32
    %c0_i32_0 = arith.constant 0 : i32
    return %arg1, %c0_i32 : i32, i32
  }
  func.func @transform_4(%arg0: i32, %arg1: i32) -> (i32, i32, i32) {
    %c0_i32 = arith.constant 0 : i32
    %c0_i32_0 = arith.constant 0 : i32
    %c0_i32_1 = arith.constant 0 : i32
    return %arg1, %c0_i32, %c0_i32_0 : i32, i32, i32
  }
}

</mosaic_0001>

<llo_original>
// kernel: tpu_custom_call.1
$region0: #{tpu_custom_call.1}
  #allocation0 [shape = 'u32[]', space=smem, size = 0x4, offset = 0x4, fixed_abs, tag = 'smem constant byte address 0x4 - core index']
  #allocation1 [shape = 'u32[144,128]{1,0:T(1,128)}', space=vmem, size = 0x12000, scoped, tag = 'internal scratch']
  #allocation2 [shape = 'f32[1,16,1]{2,1,0:T(8,128)}', space=vmem, size = 0x2000, scoped, tag = 'scratch operand']
  #allocation3 [shape = 'f32[1,16,1]{2,1,0:T(8,128)}', space=vmem, size = 0x2000, scoped, tag = 'scratch operand']
  #allocation4 [shape = 'f32[1,16,1]{2,1,0:T(8,128)}', space=vmem, size = 0x2000, scoped, tag = 'scratch operand']
  #allocation5 [shape = 'f32[1,1]{1,0:T(1,128)S(6)}', space=smem, size = 0x200, scoped, tag = 'scoped memory for tpu_custom_call.1']
  %s0 = inlined_call_operand.<no memory space> [shape: f32[1,1], index: 0, kind: input, shape index: {}]
  %s1 = inlined_call_operand.vmem [shape: bf16[16,128], index: 1, kind: input, shape index: {}]
  %s2 = inlined_call_operand.hbm [shape: bf16[128,128], index: 2, kind: input, shape index: {}]
  %s3 = inlined_call_operand.vmem [shape: s32[16,2], index: 3, kind: input, shape index: {}]
  %s4 = inlined_call_operand.hbm [shape: f32[1,8,128], index: 4, kind: output, shape index: {}]
  %s5 = sld [smem:[#allocation0]]
  $region42: #{tpu_custom_call.1} parent=0
    _
  %s7 = ssub.s32 1, %s5
  %s8 = scalar_select 0, %s7, %s5
  %9 = sst [smem:[#allocation5]] %s0
  $region1: #{tpu_custom_call.1} parent=0
    #allocation6 [shape = 'u8[32768]{0}', space=vmem, size = 0x8000, scoped, tag = 'input window, operand 2, single buffered']
    #allocation7 [shape = 's32[1]{0}', space=sflag, size = 0x4, scoped, tag = 'scoped memory for tpu_custom_call.1']
    #allocation8 [shape = 's32[1]{0}', space=sflag, size = 0x4, scoped, tag = 'scoped memory for tpu_custom_call.1']
    #allocation9 [shape = 'u8[4096]{0}', space=vmem, size = 0x1000, scoped, tag = 'output window, operand 0, single buffered']
    %10 = vsyncpa [#allocation7], 0
    %11 = vsyncpa [#allocation8], 0
    // Predicated region
    $region2: #{tpu_custom_call.1} parent=1 // pred_check
      _
    $region3: #{tpu_custom_call.1} parent=1 // pred_check_branch
      %13 = sbr.rel (0) target = $region5
    $region4: #{tpu_custom_call.1} parent=1 // pred_region
      _
    $region5: #{tpu_custom_call.1} parent=1 // pred_fallthru
      _
    // Predicated region
    $region6: #{tpu_custom_call.1} parent=1 // pred_check
      _
    $region7: #{tpu_custom_call.1} parent=1 // pred_check_branch
      %15 = sbr.rel (0) target = $region9
    $region8: #{tpu_custom_call.1} parent=1 // pred_region
      _
    $region9: #{tpu_custom_call.1} parent=1 // pred_fallthru
      _
    // Predicated region
    $region10: #{tpu_custom_call.1} parent=1 // pred_check
      _
    $region11: #{tpu_custom_call.1} parent=1 // pred_check_branch
      %17 = sbr.rel (0) target = $region13
    $region12: #{tpu_custom_call.1} parent=1 // pred_region
      %s19 = ssub.s32 1024, 1024
      %20 = vsyncadd [#allocation7], %s19
      %s21 = sshll.u32 [#allocation6], 4
      %s22 = int_to_ptr.vmem [resolvable:$true] %s21
      %27 = dma.hbm_to_vmem [thread:$0]  %s2, 1024, %s22, [#allocation7], 64, 64, 4
    $region13: #{tpu_custom_call.1} parent=1 // pred_fallthru
      _
    // Predicated region
    $region14: #{tpu_custom_call.1} parent=1 // pred_check
      _
    $region15: #{tpu_custom_call.1} parent=1 // pred_check_branch
      %29 = sbr.rel (0) target = $region17
    $region16: #{tpu_custom_call.1} parent=1 // pred_region
      _
    $region17: #{tpu_custom_call.1} parent=1 // pred_fallthru
      _
    // Predicated region
    $region18: #{tpu_custom_call.1} parent=1 // pred_check
      _
    $region19: #{tpu_custom_call.1} parent=1 // pred_check_branch
      %31 = sbr.rel (0) target = $region21
    $region20: #{tpu_custom_call.1} parent=1 // pred_region
      %32 = dma.done [#allocation7], 1024
    $region21: #{tpu_custom_call.1} parent=1 // pred_fallthru
      _
    %p34 = scmp.eq.s32.totalorder 0, 0
    // Predicated region
    $region22: #{tpu_custom_call.1} parent=1 // pred_check
      %p35 = pneg %p34
    $region23: #{tpu_custom_call.1} parent=1 // pred_check_branch
      %37 = sbr.rel (%p35) target = $region25
    $region24: #{tpu_custom_call.1} parent=1 // pred_region
      %s38 = smul.u32 0, 16
      %s39 = scalar_lea.vmem [#allocation2], %s38
      %vm40 = vcmask 7168
      %41 = vst.msk [vmem:[%s39] sm:$0xff] %vm40, -1e+30
      %42 = vst.msk [vmem:[%s39 + $0x8] sm:$0xff] %vm40, -1e+30
      %s43 = scalar_lea.vmem [#allocation3], %s38
      %44 = vst.msk [vmem:[%s43] sm:$0xff] %vm40, 0.0
      %45 = vst.msk [vmem:[%s43 + $0x8] sm:$0xff] %vm40, 0.0
      %s46 = scalar_lea.vmem [#allocation4], %s38
      %47 = vst.msk [vmem:[%s46] sm:$0xff] %vm40, 0.0
      %48 = vst.msk [vmem:[%s46 + $0x8] sm:$0xff] %vm40, 0.0
    $region25: #{tpu_custom_call.1} parent=1 // pred_fallthru
      _
    %v49 = vld [vmem:[%s1] sm:$0xf]
    %v50 = vld [vmem:[%s1 + $0x4] sm:$0xf]
    %v51 = vld [vmem:[#allocation6] sm:$0xf]
    %v52 = vld [vmem:[#allocation6 + $0x4] sm:$0xf]
    %v53 = vld [vmem:[#allocation6 + $0x8] sm:$0xf]
    %v54 = vld [vmem:[#allocation6 + $0xc] sm:$0xf]
    %v55 = vld [vmem:[#allocation6 + $0x10] sm:$0xf]
    %v56 = vld [vmem:[#allocation6 + $0x14] sm:$0xf]
    %v57 = vld [vmem:[#allocation6 + $0x18] sm:$0xf]
    %v58 = vld [vmem:[#allocation6 + $0x1c] sm:$0xf]
    %v59 = vld [vmem:[#allocation6 + $0x20] sm:$0xf]
    %v60 = vld [vmem:[#allocation6 + $0x24] sm:$0xf]
    %v61 = vld [vmem:[#allocation6 + $0x28] sm:$0xf]
    %v62 = vld [vmem:[#allocation6 + $0x2c] sm:$0xf]
    %v63 = vld [vmem:[#allocation6 + $0x30] sm:$0xf]
    %v64 = vld [vmem:[#allocation6 + $0x34] sm:$0xf]
    %v65 = vld [vmem:[#allocation6 + $0x38] sm:$0xf]
    %v66 = vld [vmem:[#allocation6 + $0x3c] sm:$0xf]
    %v69 = vunpack.c.l.b16 %v49
    %v70 = vunpack.c.l.b16 %v50
    %v71 = vpack.c.b16 %v70, %v69
    %v89 = vunpack.c.l.b16 %v51
    %v90 = vunpack.c.l.b16 %v52
    %v91 = vunpack.c.l.b16 %v53
    %v92 = vunpack.c.l.b16 %v54
    %v93 = vunpack.c.l.b16 %v55
    %v94 = vunpack.c.l.b16 %v56
    %v95 = vunpack.c.l.b16 %v57
    %v96 = vunpack.c.l.b16 %v58
    %v97 = vunpack.c.l.b16 %v59
    %v98 = vunpack.c.l.b16 %v60
    %v99 = vunpack.c.l.b16 %v61
    %v100 = vunpack.c.l.b16 %v62
    %v101 = vunpack.c.l.b16 %v63
    %v102 = vunpack.c.l.b16 %v64
    %v103 = vunpack.c.l.b16 %v65
    %v104 = vunpack.c.l.b16 %v66
    %v105 = vpack.c.b16 %v90, %v89
    %v106 = vpack.c.b16 %v92, %v91
    %v107 = vpack.c.b16 %v94, %v93
    %v108 = vpack.c.b16 %v96, %v95
    %v109 = vpack.c.b16 %v98, %v97
    %v110 = vpack.c.b16 %v100, %v99
    %v111 = vpack.c.b16 %v102, %v101
    %v112 = vpack.c.b16 %v104, %v103
    %121 = vmatprep.subr.bf16.mxu0 0
    %122 = vmatpush1.bf16.msra.mxu0 %v112
    %123 = vmatprep.subr.bf16.mxu0 0
    %124 = vmatpush1.bf16.msra.mxu0 %v111
    %125 = vmatprep.subr.bf16.mxu0 0
    %126 = vmatpush1.bf16.msra.mxu0 %v110
    %127 = vmatprep.subr.bf16.mxu0 0
    %128 = vmatpush1.bf16.msra.mxu0 %v109
    %129 = vmatprep.subr.bf16.mxu0 0
    %130 = vmatpush1.bf16.msra.mxu0 %v108
    %131 = vmatprep.subr.bf16.mxu0 0
    %132 = vmatpush1.bf16.msra.mxu0 %v107
    %133 = vmatprep.subr.bf16.mxu0 0
    %134 = vmatpush1.bf16.msra.mxu0 %v106
    %135 = vmatprep.subr.bf16.mxu0 0
    %136 = vmatpush1.bf16.msra.mxu0 %v105
    %137 = vmatprep.subr.bf16.mxu0 0
    %138 = vmatpush2.bf16.msra.mxu0 0
    %139 = vmatprep.subr.bf16.mxu0 0
    %140 = vmatpush2.bf16.msra.mxu0 0
    %141 = vmatprep.subr.bf16.mxu0 0
    %142 = vmatpush2.bf16.msra.mxu0 0
    %143 = vmatprep.subr.bf16.mxu0 0
    %144 = vmatpush2.bf16.msra.mxu0 0
    %145 = vmatprep.subr.bf16.mxu0 0
    %146 = vmatpush2.bf16.msra.mxu0 0
    %147 = vmatprep.subr.bf16.mxu0 0
    %148 = vmatpush2.bf16.msra.mxu0 0
    %149 = vmatprep.subr.bf16.mxu0 0
    %150 = vmatpush2.bf16.msra.mxu0 0
    %151 = vmatprep.subr.bf16.mxu0 0
    %152 = vmatpush2.bf16.msra.mxu0 0
    %153 = vmatprep.mubr.bf16.mxu0 0
    %154 = vmatmul.mubr.bf16.gmra.mxu0 %v71
    %v155 = vpop.f32.mrf.mxu0
    %v156 = vadd.f32 0.0, %v155
    %v157 = vpop.f32.mrf.mxu0
    %v158 = vpop.f32.mrf.mxu0
    %v159 = vadd.f32 0.0, %v158
    %v160 = vpop.f32.mrf.mxu0
    %161 = vdwg.mxu0
    %v162 = vlaneseq
    %v163 = vand.u32 %v162, 127
    %s164 = smul.u32 0, 128
    %v165 = vld [vmem:[%s3] sm:$0xff]
    %v166 = vld [vmem:[%s3 + $0x8] sm:$0xff]
    %v167 = vstv %s164
    %v168 = vsub.s32 %v165, %v167
    %v169 = vsub.s32 %v166, %v167
    %s170 = sld [smem:[#allocation5]]
    %171 = vset.pattern.permute.xlu0 0
    %172 = vperm.xlu0 %171, %v168
    %v173 = vpop.permute.xlu0 %172
    %174 = vset.pattern.permute.xlu0 0
    %175 = vperm.xlu0 %174, %v169
    %v176 = vpop.permute.xlu0 %175
    %vm177 = vcmp.eq.s32.totalorder %v163, %v173
    %vm178 = vcmp.eq.s32.totalorder %v163, %v176
    %v179 = vstv %s170
    %v180 = vsel %vm177, %v179, 0.0
    %v181 = vsel %vm178, %v179, 0.0
    %182 = vset.pattern.permute.xlu0 1
    %183 = vperm.xlu0 %182, %v168
    %v184 = vpop.permute.xlu0 %183
    %185 = vset.pattern.permute.xlu0 1
    %186 = vperm.xlu0 %185, %v169
    %v187 = vpop.permute.xlu0 %186
    %vm188 = vcmp.eq.s32.totalorder %v163, %v184
    %vm189 = vcmp.eq.s32.totalorder %v163, %v187
    %s190 = ssub.f32 1.0, %s170
    %v191 = vstv %s190
    %v192 = vsel %vm188, %v191, 0.0
    %v193 = vsel %vm189, %v191, 0.0
    %v194 = vadd.f32 %v180, %v192
    %v195 = vadd.f32 %v181, %v193
    %s196 = smul.u32 0, 16
    %s197 = scalar_lea.vmem [#allocation4], %s196
    %v198 = vld [vmem:[%s197] sm:$0xff]
    %v199 = vld [vmem:[%s197 + $0x8] sm:$0xff]
    %v200 = vmul.f32 %v194, %v156
    %v201 = vmul.f32 %v195, %v159
    %202 = vadd.xlane.f32.xlu0 %v200
    %v203 = vpop.xlane.xlu0 %202
    %204 = vadd.xlane.f32.xlu0 %v201
    %v205 = vpop.xlane.xlu0 %204
    %v206 = vadd.f32 %v198, %v203
    %v207 = vadd.f32 %v199, %v205
    %vm208 = vcmask 7168
    %209 = vst.msk [vmem:[%s197] sm:$0xff] %vm208, %v206
    %210 = vst.msk [vmem:[%s197 + $0x8] sm:$0xff] %vm208, %v207
    %p211 = scmp.lt.s32.totalorder 0, 0
    // Predicated region
    $region26: #{tpu_custom_call.1} parent=1 // pred_check
      %p212 = pneg %p211
    $region27: #{tpu_custom_call.1} parent=1 // pred_check_branch
      %214 = sbr.rel (%p212) target = $region29
    $region28: #{tpu_custom_call.1} parent=1 // pred_region
      %s215 = scalar_lea.vmem [#allocation2], %s196
      %v216 = vld [vmem:[%s215] sm:$0xff]
      %v217 = vld [vmem:[%s215 + $0x8] sm:$0xff]
      %218 = vmax.xlane.f32.xlu0 %v156
      %v219 = vpop.xlane.xlu0 %218
      %220 = vmax.xlane.f32.xlu0 %v159
      %v221 = vpop.xlane.xlu0 %220
      %v222 = vmax.f32 %v216, %v219
      %v223 = vmax.f32 %v217, %v221
      %s224 = scalar_lea.vmem [#allocation3], %s196
      %v225 = vld [vmem:[%s224] sm:$0xff]
      %v226 = vld [vmem:[%s224 + $0x8] sm:$0xff]
      %v227 = vsub.f32 %v216, %v222
      %v228 = vsub.f32 %v217, %v223
      %v229 = vmul.f32 %v227, 1.442695
      %v230 = vpow.pop %v229
      %v231 = vmul.f32 %v228, 1.442695
      %v232 = vpow.pop %v231
      %v233 = vmul.f32 %v225, %v230
      %v234 = vmul.f32 %v226, %v232
      %236 = vset.pattern.permute.xlu0 0
      %237 = vperm.xlu0 %236, %v222
      %v238 = vpop.permute.xlu0 %237
      %241 = vset.pattern.permute.xlu0 0
      %242 = vperm.xlu0 %241, %v223
      %v243 = vpop.permute.xlu0 %242
      %v245 = vsub.f32 %v156, %v238
      %v246 = vsub.f32 %v159, %v243
      %v247 = vmul.f32 %v245, 1.442695
      %v248 = vpow.pop %v247
      %v249 = vmul.f32 %v246, 1.442695
      %v250 = vpow.pop %v249
      %251 = vadd.xlane.f32.xlu0 %v248
      %v252 = vpop.xlane.xlu0 %251
      %253 = vadd.xlane.f32.xlu0 %v250
      %v254 = vpop.xlane.xlu0 %253
      %v255 = vadd.f32 %v233, %v252
      %v256 = vadd.f32 %v234, %v254
      %257 = vst.msk [vmem:[%s224] sm:$0xff] %vm208, %v255
      %258 = vst.msk [vmem:[%s224 + $0x8] sm:$0xff] %vm208, %v256
      %259 = vst.msk [vmem:[%s215] sm:$0xff] %vm208, %v222
      %260 = vst.msk [vmem:[%s215 + $0x8] sm:$0xff] %vm208, %v223
    $region29: #{tpu_custom_call.1} parent=1 // pred_fallthru
      _
    // Predicated region
    $region30: #{tpu_custom_call.1} parent=1 // pred_check
      %p261 = pneg %p34
    $region31: #{tpu_custom_call.1} parent=1 // pred_check_branch
      %263 = sbr.rel (%p261) target = $region33
    $region32: #{tpu_custom_call.1} parent=1 // pred_region
      %s264 = ssub.s32 16, %s164
      %v265 = vstv %s264
      %vm266 = vcmp.lt.s32.totalorder %v163, %v265
      %v267 = vsel %vm266, %v156, -1e+30
      %v268 = vsel %vm266, %v159, -1e+30
      %s269 = scalar_lea.vmem [#allocation2], %s196
      %v270 = vld [vmem:[%s269] sm:$0xff]
      %v271 = vld [vmem:[%s269 + $0x8] sm:$0xff]
      %272 = vmax.xlane.f32.xlu0 %v267
      %v273 = vpop.xlane.xlu0 %272
      %274 = vmax.xlane.f32.xlu0 %v268
      %v275 = vpop.xlane.xlu0 %274
      %v276 = vmax.f32 %v270, %v273
      %v277 = vmax.f32 %v271, %v275
      %s278 = scalar_lea.vmem [#allocation3], %s196
      %v279 = vld [vmem:[%s278] sm:$0xff]
      %v280 = vld [vmem:[%s278 + $0x8] sm:$0xff]
      %v281 = vsub.f32 %v270, %v276
      %v282 = vsub.f32 %v271, %v277
      %v283 = vmul.f32 %v281, 1.442695
      %v284 = vpow.pop %v283
      %v285 = vmul.f32 %v282, 1.442695
      %v286 = vpow.pop %v285
      %v287 = vmul.f32 %v279, %v284
      %v288 = vmul.f32 %v280, %v286
      %290 = vset.pattern.permute.xlu0 0
      %291 = vperm.xlu0 %290, %v276
      %v292 = vpop.permute.xlu0 %291
      %295 = vset.pattern.permute.xlu0 0
      %296 = vperm.xlu0 %295, %v277
      %v297 = vpop.permute.xlu0 %296
      %v299 = vsub.f32 %v267, %v292
      %v300 = vsub.f32 %v268, %v297
      %v301 = vmul.f32 %v299, 1.442695
      %v302 = vpow.pop %v301
      %v303 = vmul.f32 %v300, 1.442695
      %v304 = vpow.pop %v303
      %305 = vadd.xlane.f32.xlu0 %v302
      %v306 = vpop.xlane.xlu0 %305
      %307 = vadd.xlane.f32.xlu0 %v304
      %v308 = vpop.xlane.xlu0 %307
      %v309 = vadd.f32 %v287, %v306
      %v310 = vadd.f32 %v288, %v308
      %311 = vst.msk [vmem:[%s278] sm:$0xff] %vm208, %v309
      %312 = vst.msk [vmem:[%s278 + $0x8] sm:$0xff] %vm208, %v310
      %313 = vst.msk [vmem:[%s269] sm:$0xff] %vm208, %v276
      %314 = vst.msk [vmem:[%s269 + $0x8] sm:$0xff] %vm208, %v277
      %v315 = vlaneseq
      %v316 = vshrl.u32 %v315, 7
      %v317 = vadd.s32 %v316, 8
      %v318 = vstv %s196
      %v319 = vadd.s32 %v318, %v316
      %v320 = vadd.s32 %v318, %v317
      %vm321 = vcmp.lt.s32.totalorder %v319, 8
      %vm322 = vcmp.lt.s32.totalorder %v320, 8
      %v323 = vsel %vm321, 1, 0
      %v324 = vsel %vm322, 1, 0
      %v325 = vcvt.s32.f32 %v323
      %v326 = vcvt.s32.f32 %v324
      %v327 = vld [vmem:[%s269] sm:$0xff]
      %v328 = vld [vmem:[%s269 + $0x8] sm:$0xff]
      %v329 = vld [vmem:[%s278] sm:$0xff]
      %v330 = vld [vmem:[%s278 + $0x8] sm:$0xff]
      %v331 = vlog2.pop %v329
      %v332 = vmul.f32 %v331, 0.6931472
      %v333 = vlog2.pop %v330
      %v334 = vmul.f32 %v333, 0.6931472
      %v335 = vadd.f32 %v327, %v332
      %v336 = vadd.f32 %v328, %v334
      %v337 = vld [vmem:[%s197] sm:$0xff]
      %v338 = vld [vmem:[%s197 + $0x8] sm:$0xff]
      %v339 = vsub.f32 %v335, %v337
      %v340 = vsub.f32 %v336, %v338
      %v341 = vmul.f32 %v339, %v325
      %v342 = vmul.f32 %v340, %v326
      %v343 = vsel %vm208, %v341, 0.0
      %v344 = vsel %vm208, %v342, 0.0
      %v345 = vadd.f32 %v343, %v344
      %346 = vadd.xlane.f32.xlu0 %v345
      %v347 = vpop.xlane.xlu0 %346
      %v348 = vrot.slane %v347, 4
      %v349 = vadd.f32 %v347, %v348
      %v350 = vrot.slane %v349, 2
      %v351 = vadd.f32 %v349, %v350
      %v352 = vrot.slane %v351, 1
      %v353 = vadd.f32 %v351, %v352
      %s354 = vtos %v353
      %v355 = vstv %s354
      %356 = vst [vmem:[#allocation9] sm:$0xff] %v355
    $region33: #{tpu_custom_call.1} parent=1 // pred_fallthru
      _
    // Predicated region
    $region34: #{tpu_custom_call.1} parent=1 // pred_check
      _
    $region35: #{tpu_custom_call.1} parent=1 // pred_check_branch
      %358 = sbr.rel (0) target = $region37
    $region36: #{tpu_custom_call.1} parent=1 // pred_region
      %s360 = ssub.s32 128, 128
      %361 = vsyncadd [#allocation8], %s360
      %s363 = sshll.u32 [#allocation9], 4
      %s364 = int_to_ptr.vmem [resolvable:$true] %s363
      %366 = dma.vmem_to_hbm [thread:$0]  %s364, 128, %s4, [#allocation8]
    $region37: #{tpu_custom_call.1} parent=1 // pred_fallthru
      _
    // Predicated region
    $region38: #{tpu_custom_call.1} parent=1 // pred_check
      _
    $region39: #{tpu_custom_call.1} parent=1 // pred_check_branch
      %368 = sbr.rel (0) target = $region41
    $region40: #{tpu_custom_call.1} parent=1 // pred_region
      %369 = dma.done [#allocation8], 128
    $region41: #{tpu_custom_call.1} parent=1 // pred_fallthru
      _
    %370 = vsyncpa [#allocation7], 1
    %371 = vsyncpa [#allocation8], 1

</llo_original>
